<compile_context>
chip_gen: v7x
topology: tpu7x:2x2x1
jax: 0.10.0
libtpu: 0.0.40
codegen_flags: <defaults>
</compile_context>

<pallas_src>
import functools

import jax
import jax.numpy as jnp
from jax.experimental import pallas as pl
from jax.experimental.pallas import tpu as pltpu

_MIB = 1024 * 1024


def _cdiv(a, b):
    return (a + b - 1) // b


def _round_up(x, m):
    return _cdiv(x, m) * m


def _round_down(x, m):
    return (x // m) * m


def _sublane_multiple(dtype):
    # rows per fully-packed sublane group: 8 for 4-byte, 16 for bf16, 32 for int8/fp8
    return max(8, 32 // jnp.dtype(dtype).itemsize)


def _vmem_budget():
    """(double-buffered X budget, vmem_limit_bytes), generation-aware."""
    try:
        cap = int(pltpu.get_tpu_info().vmem_capacity_bytes)
    except Exception:  # pragma: no cover - conservative default (v7x-safe)
        cap = 64 * _MIB
    limit = max(min(cap - 8 * _MIB, 112 * _MIB), 32 * _MIB)   # 56 MiB v7x, 112 MiB v5e/v6e
    x_budget = max(limit - 12 * _MIB, 16 * _MIB)              # headroom for out/w/Mosaic scratch
    return x_budget, limit


def _pick_tile(rows, per_row_bytes, mult, budget, min_steps=4):
    """Largest row tile that fits the VMEM budget, keeps >=min_steps grid steps,
    is a multiple of `mult`, and never exceeds the array extent."""
    t = _round_down(max(budget // per_row_bytes, mult), mult)
    t = min(t, _round_up(_cdiv(rows, min_steps), mult))   # keep pipeline + both TCs busy
    t = min(t, _round_down(rows, mult))                   # block must not exceed array
    return t


# --------------------------------------------------------------------------
# kernels
# --------------------------------------------------------------------------
def _packed_kernel(b_ref, x_ref, w_ref, o_ref):
    # b_ref: SMEM (1,) intercept
    # x_ref: VMEM (tp, 128)   lane-dense packed rows of X (native dtype)
    # w_ref: VMEM (128, g)    block-diagonal relu(weights) (resident)
    # o_ref: VMEM (1, g, tp)  lane-dense output block (f32)
    x = x_ref[...].astype(jnp.float32)
    dot = jnp.dot(x, w_ref[...], preferred_element_type=jnp.float32)   # (tp, g)
    tp, g = dot.shape
    # tiny result transpose -> lane-dense store (rides the idle XLU slot)
    o_ref[...] = (jnp.transpose(dot) + b_ref[0]).reshape(1, g, tp)


def _unpacked_kernel(b_ref, x_ref, w_ref, o_ref, *, f_total, tk):
    # b_ref: SMEM (1,) intercept
    # x_ref: VMEM (tm, tk)    row/K tile of X (native dtype)
    # w_ref: VMEM (1, tk)     weights K tile
    # o_ref: VMEM (1, 1, tm)  lane-dense output block, revisited across K
    k = pl.program_id(1)
    x = x_ref[...].astype(jnp.float32)
    w = jnp.maximum(w_ref[...].astype(jnp.float32), 0.0)   # relu(weights)
    if f_total % tk != 0:
        # mask the clipped K tail (garbage in the padded region of the last block)
        cols = k * tk + jax.lax.broadcasted_iota(jnp.int32, (1, tk), 1)
        valid = cols < f_total
        w = jnp.where(valid, w, 0.0)
        x = jnp.where(valid, x, 0.0)
    part = jax.lax.dot_general(
        x, w, dimension_numbers=(((1,), (1,)), ((), ())),
        preferred_element_type=jnp.float32)                 # (tm, 1), MXU
    tm = part.shape[0]
    part = jnp.transpose(part).reshape(1, 1, tm)            # tiny relayout -> lane-dense

    @pl.when(k == 0)
    def _():
        o_ref[...] = part + b_ref[0]

    @pl.when(k > 0)
    def _():
        o_ref[...] = o_ref[...] + part


# --------------------------------------------------------------------------
# wrapper
# --------------------------------------------------------------------------
def largesse_logprob(X, weights, intercept, *, tk=None, return_weights=False):
    """Forward of LARGeSSE_Logprob: relu(weights) matvec + intercept.

    X: (N, F) (streamed in its native dtype), weights: (F,) f32, intercept: scalar.
    Returns (N,) float32 (optionally also relu(weights)).
    """
    X = jnp.asarray(X)                       # keep native dtype: stream as-is
    N, F = X.shape
    w_f32 = jnp.asarray(weights, jnp.float32).reshape(F)
    cw = jnp.maximum(w_f32, 0.0)             # relu(weights) (tiny)
    b = jnp.asarray(intercept, jnp.float32).reshape(1)

    itemsize = jnp.dtype(X.dtype).itemsize
    sub = _sublane_multiple(X.dtype)
    x_budget, vmem_limit = _vmem_budget()

    cost = pl.CostEstimate(flops=2 * N * F, transcendentals=0,
                           bytes_accessed=N * F * itemsize + F * 4 + N * 4)

    bigdot = None

    # --- packed fast path: F < 128 and 128 % F == 0 -> g rows per 128-lane row ---
    if F < 128 and 128 % F == 0:
        g = 128 // F
        if N % g == 0 and N // g >= sub:
            Np = N // g
            per_row = 2 * 128 * itemsize + 2 * _round_up(g, 8) * 4   # X + out (dbl-buffered)
            tp = _pick_tile(Np, per_row, sub, x_budget)
            if tp >= sub:
                grid = (_cdiv(Np, tp),)
                Xp = X.reshape(Np, 128)      # free: contiguous row-major reshape
                # block-diagonal weights: W[j*F + f, j] = relu(w)[f]
                w_mat = jnp.kron(jnp.eye(g, dtype=jnp.float32), cw.reshape(F, 1))
                out = pl.pallas_call(
                    _packed_kernel,
                    out_shape=jax.ShapeDtypeStruct((grid[0], g, tp), jnp.float32),
                    grid_spec=pltpu.PrefetchScalarGridSpec(
                        num_scalar_prefetch=0,
                        grid=grid,
                        in_specs=[
                            pl.BlockSpec(memory_space=pltpu.MemorySpace.SMEM),  # intercept
                            pl.BlockSpec((tp, 128), lambda i: (i, 0)),          # X (streamed)
                            pl.BlockSpec((128, g), lambda i: (0, 0)),           # W (resident)
                        ],
                        out_specs=pl.BlockSpec((1, g, tp), lambda i: (i, 0, 0)),
                    ),
                    compiler_params=pltpu.CompilerParams(
                        dimension_semantics=("parallel",),
                        vmem_limit_bytes=int(vmem_limit)),
                    cost_estimate=cost,
                )(b, Xp, w_mat)
                # (G, g, tp) -> original row order, drop the clipped tail
                bigdot = jnp.transpose(out, (0, 2, 1)).reshape(-1)[:N]

    # --- general path (any F), optional K tiling for very large F ---
    if bigdot is None and N >= sub:
        TK_MAX = 32768
        if tk is None:
            tk_eff = F if F <= TK_MAX else TK_MAX
        else:
            tk_eff = F if tk >= F else max(128, _round_down(int(tk), 128))
        kk = _cdiv(F, tk_eff)
        tk_pad = _round_up(tk_eff, 128)
        per_row = 2 * tk_pad * itemsize + 2 * 8 * 4          # X + out (dbl-buffered)
        tm = _pick_tile(N, per_row, sub, x_budget)
        if tm >= sub:
            grid = (_cdiv(N, tm), kk)
            kern = functools.partial(_unpacked_kernel, f_total=F, tk=tk_eff)
            out = pl.pallas_call(
                kern,
                out_shape=jax.ShapeDtypeStruct((grid[0], 1, tm), jnp.float32),
                grid_spec=pltpu.PrefetchScalarGridSpec(
                    num_scalar_prefetch=0,
                    grid=grid,
                    in_specs=[
                        pl.BlockSpec(memory_space=pltpu.MemorySpace.SMEM),      # intercept
                        pl.BlockSpec((tm, tk_eff), lambda i, k: (i, k)),        # X (streamed)
                        pl.BlockSpec((1, tk_eff), lambda i, k: (0, k)),         # weights
                    ],
                    out_specs=pl.BlockSpec((1, 1, tm), lambda i, k: (i, 0, 0)),
                ),
                compiler_params=pltpu.CompilerParams(
                    dimension_semantics=("parallel", "arbitrary"),
                    vmem_limit_bytes=int(vmem_limit)),
                cost_estimate=cost,
            )(b, X, w_f32.reshape(1, F))
            bigdot = out.reshape(-1)[:N]

    if bigdot is None:
        # tiny-N fallback: not worth a kernel launch
        bigdot = X.astype(jnp.float32) @ cw + b[0]

    if return_weights:
        return bigdot, cw
    return bigdot


# --------------------------------------------------------------------------
# demo / self-check
# --------------------------------------------------------------------------
if __name__ == "__main__":
    key = jax.random.PRNGKey(0)
    k1, k2, k3, k4, k5, k6, k7, k8 = jax.random.split(key, 8)

    def ref_fwd(X, w, b):
        cw = jnp.maximum(jnp.asarray(w, jnp.float32), 0.0)
        return jnp.sum(X.astype(jnp.float32) * cw[None, :], axis=-1) + jnp.float32(b)

    # 1) packed lane-dense path (F=32 -> g=4 rows per 128-lane register row), f32
    N, F = 200, 32
    X = jax.random.normal(k1, (N, F), dtype=jnp.float32)
    w = jax.random.uniform(k2, (F,), dtype=jnp.float32, minval=-0.5, maxval=1.0)
    b = jnp.float32(0.25)
    y, cw = largesse_logprob(X, w, b, return_weights=True)
    jax.block_until_ready(y)
    assert y.shape == (N,)
    assert jnp.allclose(y, ref_fwd(X, w, b), atol=2e-3, rtol=2e-3)
    assert jnp.allclose(cw, jnp.maximum(w, 0.0))

    # 2) general path, single K block (F=160 > 128, N not a multiple of the tile)
    N2, F2 = 200, 160
    X2 = jax.random.normal(k3, (N2, F2), dtype=jnp.float32)
    w2 = jax.random.uniform(k4, (F2,), dtype=jnp.float32, minval=-0.5, maxval=1.0)
    y2 = largesse_logprob(X2, w2, jnp.float32(-0.1))
    jax.block_until_ready(y2)
    assert jnp.allclose(y2, ref_fwd(X2, w2, -0.1), atol=2e-3, rtol=2e-3)

    # 3) general path, K-tiled reduction with masked K tail (F=200, tk=128 -> 2 K blocks)
    N3, F3 = 200, 200
    X3 = jax.random.normal(k5, (N3, F3), dtype=jnp.float32)
    w3 = jax.random.uniform(k6, (F3,), dtype=jnp.float32, minval=-0.5, maxval=1.0)
    y3 = largesse_logprob(X3, w3, jnp.float32(1.5), tk=128)
    jax.block_until_ready(y3)
    assert jnp.allclose(y3, ref_fwd(X3, w3, 1.5), atol=2e-3, rtol=2e-3)

    # 4) packed path with bf16 X (native-dtype streaming, 16-row sublane multiple)
    N4, F4 = 256, 64
    X4 = jax.random.normal(k7, (N4, F4), dtype=jnp.bfloat16)
    w4 = jax.random.uniform(k8, (F4,), dtype=jnp.float32, minval=-0.5, maxval=1.0)
    y4 = largesse_logprob(X4, w4, jnp.float32(0.0))
    jax.block_until_ready(y4)
    assert jnp.allclose(y4, ref_fwd(X4, w4, 0.0), atol=1e-2, rtol=1e-2)

    print("KERNEL_OK")
</pallas_src>

<mosaic_0001>
module attributes {stable_mosaic.version = 11 : i64} {
  func.func @_packed_kernel(%arg0: i32, %arg1: memref<1xf32, #tpu.memory_space<smem>>, %arg2: memref<16x128xf32, #tpu.memory_space<vmem>>, %arg3: memref<128x4xf32, #tpu.memory_space<vmem>>, %arg4: memref<1x4x16xf32, #tpu.memory_space<vmem>>) attributes {dimension_semantics = [#tpu.dimension_semantics<parallel>], iteration_bounds = array<i64: 4>, scalar_prefetch = 0 : i64, scratch_operands = 0 : i64, tpu.core_type = #tpu.core_type<tc>, window_params = [{transform_indices = @transform_0, window_bounds = array<i64: 1>}, {transform_indices = @transform_1, window_bounds = array<i64: 16, 128>}, {pipeline_mode = #tpu.pipeline_mode<synchronous>, transform_indices = @transform_2, window_bounds = array<i64: 128, 4>}, {transform_indices = @transform_3, window_bounds = array<i64: 1, 4, 16>}]} {
    %c0 = arith.constant 0 : index
    %c0_0 = arith.constant 0 : index
    %0 = vector.load %arg2[%c0, %c0_0] : memref<16x128xf32, #tpu.memory_space<vmem>>, vector<16x128xf32>
    %c0_1 = arith.constant 0 : index
    %c0_2 = arith.constant 0 : index
    %1 = vector.load %arg3[%c0_1, %c0_2] : memref<128x4xf32, #tpu.memory_space<vmem>>, vector<128x4xf32>
    %cst = arith.constant dense<0.000000e+00> : vector<16x4xf32>
    %2 = tpu.matmul %0, %1, %cst {dimension_numbers = #tpu.dot_dimension_numbers<[1], [0], [0], [1], [0, 0, 1, 1], [], []>} : vector<16x128xf32>, vector<128x4xf32>, vector<16x4xf32> -> vector<16x4xf32>
    %3 = tpu.transpose %2, [1, 0] : vector<16x4xf32> -> vector<4x16xf32>
    %c0_3 = arith.constant 0 : index
    %4 = memref.load %arg1[%c0_3] : memref<1xf32, #tpu.memory_space<smem>>
    %5 = vector.broadcast %4 : f32 to vector<4x16xf32>
    %6 = arith.addf %3, %5 : vector<4x16xf32>
    %7 = vector.shape_cast %6 : vector<4x16xf32> to vector<1x4x16xf32>
    %c0_4 = arith.constant 0 : index
    %c0_5 = arith.constant 0 : index
    %c0_6 = arith.constant 0 : index
    %8 = vector.load %arg4[%c0_4, %c0_5, %c0_6] : memref<1x4x16xf32, #tpu.memory_space<vmem>>, vector<1x4x16xf32>
    tpu.vector_store %arg4[%c0_4, %c0_5, %c0_6], %7 {strides = array<i32>} : memref<1x4x16xf32, #tpu.memory_space<vmem>>, vector<1x4x16xf32>,
    return
  }
  func.func @transform_0(%arg0: i32) -> i32 {
    %c0_i32 = arith.constant 0 : i32
    %c0_i32_0 = arith.constant 0 : i32
    return %c0_i32 : i32
  }
  func.func @transform_1(%arg0: i32) -> (i32, i32) {
    %c0_i32 = arith.constant 0 : i32
    %c0_i32_0 = arith.constant 0 : i32
    return %arg0, %c0_i32 : i32, i32
  }
  func.func @transform_2(%arg0: i32) -> (i32, i32) {
    %c0_i32 = arith.constant 0 : i32
    %c0_i32_0 = arith.constant 0 : i32
    %c0_i32_1 = arith.constant 0 : i32
    return %c0_i32, %c0_i32_0 : i32, i32
  }
  func.func @transform_3(%arg0: i32) -> (i32, i32, i32) {
    %c0_i32 = arith.constant 0 : i32
    %c0_i32_0 = arith.constant 0 : i32
    %c0_i32_1 = arith.constant 0 : i32
    return %arg0, %c0_i32, %c0_i32_0 : i32, i32, i32
  }
}

</mosaic_0001>

<llo_original>
// kernel: tpu_custom_call.1
$region0: #{tpu_custom_call.1}
  #allocation0 [shape = 'u32[]', space=smem, size = 0x4, offset = 0x4, fixed_abs, tag = 'smem constant byte address 0x4 - core index']
  #allocation1 [shape = 'u32[144,128]{1,0:T(1,128)}', space=vmem, size = 0x12000, scoped, tag = 'internal scratch']
  #allocation2 [shape = 'f32[1]{0:T(128)S(6)}', space=smem, size = 0x200, scoped, tag = 'scoped memory for tpu_custom_call.1']
  %s0 = inlined_call_operand.<no memory space> [shape: f32[1], index: 0, kind: input, shape index: {}]
  %s1 = inlined_call_operand.vmem [shape: f32[50,128], index: 1, kind: input, shape index: {}]
  %s2 = inlined_call_operand.vmem [shape: f32[128,4], index: 2, kind: input, shape index: {}]
  %s3 = inlined_call_operand.hbm [shape: f32[4,4,16], index: 3, kind: output, shape index: {}]
  %s4 = sld [smem:[#allocation0]]
  $region45: #{tpu_custom_call.1} parent=0
    _
  %s6 = ssub.s32 1, %s4
  %s7 = scalar_select 0, %s6, %s4
  %8 = sst [smem:[#allocation2]] %s0
  $region1: #{tpu_custom_call.1} parent=0
    #allocation3 [shape = 'u8[4096]{0}', space=vmem, size = 0x1000, scoped, tag = 'output window, operand 0']
    #allocation4 [shape = 's32[2]{0}', space=sflag, size = 0x8, scoped, tag = 'scoped memory for tpu_custom_call.1']
    %9 = vsyncpa [#allocation4], 0
    %s10 = scalar_lea.sflag [#allocation4], 1
    %11 = vsyncpa %s10, 0
    loop: start=0, step=1, limit=6
    $region2: #{tpu_custom_call.1} parent=1 // loop_pre_header
      _
    $region3: #{tpu_custom_call.1} parent=1 // loop_header
      %s13 = sphi 0, %s17
      %p14 = scmp.ge.s32.totalorder %s13, 6
      %s21 = sphi 0, %s21
      %s23 = sphi 0, %s21
      %s24 = sphi 0, %s23
      %s38 = sphi 0, %s24
      %s44 = sphi 0, %s46
      %s47 = sphi 0, %s44
      %s48 = sphi 0, %s47
      %s64 = sphi 0, %s48
      %s68 = sphi 0, %s68
      %s70 = sphi 0, %s68
      %s71 = sphi 0, %s70
      %s85 = sphi 0, %s71
      %s91 = sphi 0, %s93
      %s94 = sphi 0, %s91
      %s95 = sphi 0, %s94
      %s111 = sphi 0, %s95
    $region4: #{tpu_custom_call.1} parent=1 // loop_header_branch
      %16 = sbr.rel (%p14) target = $region8
    $region5: #{tpu_custom_call.1} parent=1 // loop_body
      %s18 = ssub.s32 %s13, 1
      %s19 = ssub.s32 %s13, 2
      %s20 = sadd.s32 %s13, 1
      %s22 = sadd.s32 %s21, 1
      %p25 = scmp.eq.s32.totalorder %s13, 3
      %p26 = scmp.ne.s32.totalorder %s21, %s23
      %p27 = scmp.eq.s32.totalorder %s13, 0
      %p28 = por %p26, %p27
      %p29 = scmp.ne.s32.totalorder %s21, %s23
      %p30 = scmp.eq.s32.totalorder %s18, 3
      %p31 = por %p29, %p30
      %p32 = scmp.ne.s32.totalorder %s23, %s24
      %p33 = scmp.eq.s32.totalorder %s18, 0
      %p34 = por %p32, %p33
      %p35 = scmp.ne.s32.totalorder %s23, %s24
      %p36 = scmp.eq.s32.totalorder %s19, 3
      %p37 = por %p35, %p36
      %p39 = scmp.ne.s32.totalorder %s24, %s38
      %p40 = scmp.eq.s32.totalorder %s19, 0
      %p41 = por %p39, %p40
      %s42 = ssub.s32 %s13, %s20
      %p43 = scmp.eq.s32.totalorder %s42, 0
      %s45 = sadd.s32 %s44, 1
      %s46 = scalar_select %p43, %s44, %s45
      %p49 = pneg %p43
      %p50 = scmp.eq.s32.totalorder %s13, 3
      %p51 = por %p49, %p50
      %p52 = scmp.ne.s32.totalorder %s44, %s47
      %p53 = scmp.eq.s32.totalorder %s13, 0
      %p54 = por %p52, %p53
      %p55 = scmp.ne.s32.totalorder %s44, %s47
      %p56 = scmp.eq.s32.totalorder %s18, 3
      %p57 = por %p55, %p56
      %p58 = scmp.ne.s32.totalorder %s47, %s48
      %p59 = scmp.eq.s32.totalorder %s18, 0
      %p60 = por %p58, %p59
      %p61 = scmp.ne.s32.totalorder %s47, %s48
      %p62 = scmp.eq.s32.totalorder %s19, 3
      %p63 = por %p61, %p62
      %p65 = scmp.ne.s32.totalorder %s48, %s64
      %p66 = scmp.eq.s32.totalorder %s19, 0
      %p67 = por %p65, %p66
      %s69 = sadd.s32 %s68, 1
      %p72 = scmp.eq.s32.totalorder %s13, 3
      %p73 = scmp.ne.s32.totalorder %s68, %s70
      %p74 = scmp.eq.s32.totalorder %s13, 0
      %p75 = por %p73, %p74
      %p76 = scmp.ne.s32.totalorder %s68, %s70
      %p77 = scmp.eq.s32.totalorder %s18, 3
      %p78 = por %p76, %p77
      %p79 = scmp.ne.s32.totalorder %s70, %s71
      %p80 = scmp.eq.s32.totalorder %s18, 0
      %p81 = por %p79, %p80
      %p82 = scmp.ne.s32.totalorder %s70, %s71
      %p83 = scmp.eq.s32.totalorder %s19, 3
      %p84 = por %p82, %p83
      %p86 = scmp.ne.s32.totalorder %s71, %s85
      %p87 = scmp.eq.s32.totalorder %s19, 0
      %p88 = por %p86, %p87
      %s89 = ssub.s32 %s13, %s20
      %p90 = scmp.eq.s32.totalorder %s89, 0
      %s92 = sadd.s32 %s91, 1
      %s93 = scalar_select %p90, %s91, %s92
      %p96 = pneg %p90
      %p97 = scmp.eq.s32.totalorder %s13, 3
      %p98 = por %p96, %p97
      %p99 = scmp.ne.s32.totalorder %s91, %s94
      %p100 = scmp.eq.s32.totalorder %s13, 0
      %p101 = por %p99, %p100
      %p102 = scmp.ne.s32.totalorder %s91, %s94
      %p103 = scmp.eq.s32.totalorder %s18, 3
      %p104 = por %p102, %p103
      %p105 = scmp.ne.s32.totalorder %s94, %s95
      %p106 = scmp.eq.s32.totalorder %s18, 0
      %p107 = por %p105, %p106
      %p108 = scmp.ne.s32.totalorder %s94, %s95
      %p109 = scmp.eq.s32.totalorder %s19, 3
      %p110 = por %p108, %p109
      %p112 = scmp.ne.s32.totalorder %s95, %s111
      %p113 = scmp.eq.s32.totalorder %s19, 0
      %p114 = por %p112, %p113
      %p115 = scmp.le.s32.totalorder 1, %s13
      %p116 = scmp.lt.s32.totalorder %s13, 5
      %p117 = pnand %p115, %p116
      %p118 = pneg %p117
      // Predicated region
      $region9: #{tpu_custom_call.1} parent=5 // pred_check
        _
      $region10: #{tpu_custom_call.1} parent=5 // pred_check_branch
        %120 = sbr.rel (%p117) target = $region12
      $region11: #{tpu_custom_call.1} parent=5 // pred_region
        %s121 = ssub.s32 %s13, 1
        // Predicated region
        $region13: #{tpu_custom_call.1} parent=11 // pred_check
          %p122 = pneg %p34
        $region14: #{tpu_custom_call.1} parent=11 // pred_check_branch
          %124 = sbr.rel (%p122) target = $region16
        $region15: #{tpu_custom_call.1} parent=11 // pred_region
          _
        $region16: #{tpu_custom_call.1} parent=11 // pred_fallthru
          _
        // Predicated region
        $region17: #{tpu_custom_call.1} parent=11 // pred_check
          %p125 = pneg %p81
        $region18: #{tpu_custom_call.1} parent=11 // pred_check_branch
          %127 = sbr.rel (%p125) target = $region20
        $region19: #{tpu_custom_call.1} parent=11 // pred_region
          _
        $region20: #{tpu_custom_call.1} parent=11 // pred_fallthru
          _
      $region12: #{tpu_custom_call.1} parent=5 // pred_fallthru
        _
      %p128 = scmp.lt.s32.totalorder %s13, 4
      // Predicated region
      $region21: #{tpu_custom_call.1} parent=5 // pred_check
        %p129 = pneg %p128
      $region22: #{tpu_custom_call.1} parent=5 // pred_check_branch
        %131 = sbr.rel (%p129) target = $region24
      $region23: #{tpu_custom_call.1} parent=5 // pred_region
        // Predicated region
        $region25: #{tpu_custom_call.1} parent=23 // pred_check
          %p132 = pneg %p54
        $region26: #{tpu_custom_call.1} parent=23 // pred_check_branch
          %134 = sbr.rel (%p132) target = $region28
        $region27: #{tpu_custom_call.1} parent=23 // pred_region
          %s135 = smul.u32 2, %s13
          %s136 = ssub.s32 7, %s135
          %p137 = scmp.lt.s32.totalorder %s136, 2
          %s138 = scalar_select %p137, %s136, 2
          %s139 = smul.u32 128, %s138
          %p140 = scmp.lt.s32.totalorder %s135, 6
          %s141 = scalar_select %p140, %s135, 6
          %s142 = smul.addr %s141, 8
          %s143 = scalar_lea.vmem %s1, %s142
          %s144 = smul.u32 2, %s13
          %s145 = ssub.s32 7, %s144
          %p146 = scmp.lt.s32.totalorder %s145, 2
          %s147 = scalar_select %p146, %s145, 2
          %s148 = smul.u32 128, %s147
        $region28: #{tpu_custom_call.1} parent=23 // pred_fallthru
          _
      $region24: #{tpu_custom_call.1} parent=5 // pred_fallthru
        _
      %p149 = scmp.le.s32.totalorder 1, %s13
      %p150 = scmp.lt.s32.totalorder %s13, 5
      %p151 = pnand %p149, %p150
      %p152 = pneg %p151
      // Predicated region
      $region29: #{tpu_custom_call.1} parent=5 // pred_check
        _
      $region30: #{tpu_custom_call.1} parent=5 // pred_check_branch
        %154 = sbr.rel (%p151) target = $region32
      $region31: #{tpu_custom_call.1} parent=5 // pred_region
        %s155 = ssub.s32 %s13, 1
        %p156 = pneg %p34
        %p157 = pneg %p31
        %s158 = smul.u32 2, %s18
        %s159 = ssub.s32 7, %s158
        %p160 = scmp.lt.s32.totalorder %s159, 2
        %s161 = scalar_select %p160, %s159, 2
        %s162 = smul.u32 128, %s161
        %p163 = scmp.lt.s32.totalorder %s158, 6
        %s164 = scalar_select %p163, %s158, 6
        %s165 = smul.addr %s164, 8
        %s166 = scalar_lea.vmem %s1, %s165
        %p167 = pneg %p60
        %p168 = pneg %p57
        %p169 = pneg %p81
        %p170 = pneg %p78
        %p171 = pneg %p107
        %p172 = pneg %p104
        %s173 = sand.u32 %s94, 1
        %s174 = scalar_lea.sflag [#allocation4], %s173
        %s175 = sand.u32 %s94, 1
        %s176 = smul.addr %s175, 4
        %s177 = scalar_lea.vmem [#allocation3], %s176
        %s178 = smul.u32 2, %s18
        %s179 = ssub.s32 7, %s178
        %p180 = scmp.lt.s32.totalorder %s179, 2
        %s181 = scalar_select %p180, %s179, 2
        %s182 = smul.u32 128, %s181
        %p183 = scmp.lt.s32.totalorder %s178, 6
        %s184 = scalar_select %p183, %s178, 6
        %s185 = smul.addr %s184, 8
        %s186 = scalar_lea.vmem %s1, %s185
        %s187 = smul.u32 2, %s18
        %s188 = ssub.s32 7, %s187
        %p189 = scmp.lt.s32.totalorder %s188, 2
        %s190 = scalar_select %p189, %s188, 2
        %s191 = smul.u32 128, %s190
        %v192 = vld [vmem:[%s186] sm:$0xff]
        %v193 = vld [vmem:[%s186 + $0x8] sm:$0xff]
        %v194 = vld [vmem:[%s2] sm:$0xff]
        %v195 = vld [vmem:[%s2 + $0x8] sm:$0xff]
        %v196 = vld [vmem:[%s2 + $0x10] sm:$0xff]
        %v197 = vld [vmem:[%s2 + $0x18] sm:$0xff]
        %v198 = vld [vmem:[%s2 + $0x20] sm:$0xff]
        %v199 = vld [vmem:[%s2 + $0x28] sm:$0xff]
        %v200 = vld [vmem:[%s2 + $0x30] sm:$0xff]
        %v201 = vld [vmem:[%s2 + $0x38] sm:$0xff]
        %v202 = vld [vmem:[%s2 + $0x40] sm:$0xff]
        %v203 = vld [vmem:[%s2 + $0x48] sm:$0xff]
        %v204 = vld [vmem:[%s2 + $0x50] sm:$0xff]
        %v205 = vld [vmem:[%s2 + $0x58] sm:$0xff]
        %v206 = vld [vmem:[%s2 + $0x60] sm:$0xff]
        %v207 = vld [vmem:[%s2 + $0x68] sm:$0xff]
        %v208 = vld [vmem:[%s2 + $0x70] sm:$0xff]
        %v209 = vld [vmem:[%s2 + $0x78] sm:$0xff]
        %210 = vmatprep.subr.mxu0 0.0
        %211 = vmatpush1.msra.mxu0 %v194
        %212 = vmatprep.subr.mxu0 0.0
        %213 = vmatpush1.msra.mxu0 %v195
        %214 = vmatprep.subr.mxu0 0.0
        %215 = vmatpush1.msra.mxu0 %v196
        %216 = vmatprep.subr.mxu0 0.0
        %217 = vmatpush1.msra.mxu0 %v197
        %218 = vmatprep.subr.mxu0 0.0
        %219 = vmatpush1.msra.mxu0 %v198
        %220 = vmatprep.subr.mxu0 0.0
        %221 = vmatpush1.msra.mxu0 %v199
        %222 = vmatprep.subr.mxu0 0.0
        %223 = vmatpush1.msra.mxu0 %v200
        %224 = vmatprep.subr.mxu0 0.0
        %225 = vmatpush1.msra.mxu0 %v201
        %226 = vmatprep.subr.mxu0 0.0
        %227 = vmatpush1.msra.mxu0 %v202
        %228 = vmatprep.subr.mxu0 0.0
        %229 = vmatpush1.msra.mxu0 %v203
        %230 = vmatprep.subr.mxu0 0.0
        %231 = vmatpush1.msra.mxu0 %v204
        %232 = vmatprep.subr.mxu0 0.0
        %233 = vmatpush1.msra.mxu0 %v205
        %234 = vmatprep.subr.mxu0 0.0
        %235 = vmatpush1.msra.mxu0 %v206
        %236 = vmatprep.subr.mxu0 0.0
        %237 = vmatpush1.msra.mxu0 %v207
        %238 = vmatprep.subr.mxu0 0.0
        %239 = vmatpush1.msra.mxu0 %v208
        %240 = vmatprep.subr.mxu0 0.0
        %241 = vmatpush1.msra.mxu0 %v209
        %242 = vmatprep.subr.mxu0 0.0
        %243 = vmatpush1.msra.mxu0 0.0
        %244 = vmatprep.subr.mxu0 0.0
        %245 = vmatpush1.msra.mxu0 0.0
        %246 = vmatprep.subr.mxu0 0.0
        %247 = vmatpush1.msra.mxu0 0.0
        %248 = vmatprep.subr.mxu0 0.0
        %249 = vmatpush1.msra.mxu0 0.0
        %250 = vmatprep.subr.mxu0 0.0
        %251 = vmatpush1.msra.mxu0 0.0
        %252 = vmatprep.subr.mxu0 0.0
        %253 = vmatpush1.msra.mxu0 0.0
        %254 = vmatprep.subr.mxu0 0.0
        %255 = vmatpush1.msra.mxu0 0.0
        %256 = vmatprep.subr.mxu0 0.0
        %257 = vmatpush1.msra.mxu0 0.0
        %258 = vmatprep.subr.mxu0 0.0
        %259 = vmatpush1.msra.mxu0 0.0
        %260 = vmatprep.subr.mxu0 0.0
        %261 = vmatpush1.msra.mxu0 0.0
        %262 = vmatprep.subr.mxu0 0.0
        %263 = vmatpush1.msra.mxu0 0.0
        %264 = vmatprep.subr.mxu0 0.0
        %265 = vmatpush1.msra.mxu0 0.0
        %266 = vmatprep.subr.mxu0 0.0
        %267 = vmatpush1.msra.mxu0 0.0
        %268 = vmatprep.subr.mxu0 0.0
        %269 = vmatpush1.msra.mxu0 0.0
        %270 = vmatprep.subr.mxu0 0.0
        %271 = vmatpush1.msra.mxu0 0.0
        %272 = vmatprep.subr.mxu0 0.0
        %273 = vmatpush1.msra.mxu0 0.0
        %274 = vmatprep.mubr.f32.mxu0 0.0
        %275 = vmatmul.mubr.f32.gmra.mrb[0].mxu0 %v192
        %v276 = vpop.f32.mrb[0].mxu0
        %v277 = vadd.f32 0.0, %v276
        %v278 = vpop.f32.mrb[0].mxu0
        %279 = vmatprep.mubr.f32.mxu0 0.0
        %280 = vmatmul.mubr.f32.gmra.mrb[0].mxu0 %v193
        %v281 = vpop.f32.mrb[0].mxu0
        %v282 = vadd.f32 0.0, %v281
        %v283 = vpop.f32.mrb[0].mxu0
        %284 = vdwg.mxu0
        %285 = vxpose.xlu0.b32.start [1/16] %v277, 128
        %286 = vxpose.xlu0.b32.cont [2/16] %v282, 128
        %287 = vxpose.xlu0.b32.cont [3/16] 0.0, 128
        %288 = vxpose.xlu0.b32.cont [4/16] 0.0, 128
        %289 = vxpose.xlu0.b32.cont [5/16] 0.0, 128
        %290 = vxpose.xlu0.b32.cont [6/16] 0.0, 128
        %291 = vxpose.xlu0.b32.cont [7/16] 0.0, 128
        %292 = vxpose.xlu0.b32.cont [8/16] 0.0, 128
        %293 = vxpose.xlu0.b32.cont [9/16] 0.0, 128
        %294 = vxpose.xlu0.b32.cont [10/16] 0.0, 128
        %295 = vxpose.xlu0.b32.cont [11/16] 0.0, 128
        %296 = vxpose.xlu0.b32.cont [12/16] 0.0, 128
        %297 = vxpose.xlu0.b32.cont [13/16] 0.0, 128
        %298 = vxpose.xlu0.b32.cont [14/16] 0.0, 128
        %299 = vxpose.xlu0.b32.cont [15/16] 0.0, 128
        %300 = vxpose.xlu0.b32.end [16/16] 0.0, 128
        %v301 = vpop.trf.xlu0
        %v302 = vpop.trf.xlu0
        %v303 = vpop.trf.xlu0
        %v304 = vpop.trf.xlu0
        %v305 = vpop.trf.xlu0
        %v306 = vpop.trf.xlu0
        %v307 = vpop.trf.xlu0
        %v308 = vpop.trf.xlu0
        %v309 = vpop.trf.xlu0
        %v310 = vpop.trf.xlu0
        %v311 = vpop.trf.xlu0
        %v312 = vpop.trf.xlu0
        %v313 = vpop.trf.xlu0
        %v314 = vpop.trf.xlu0
        %v315 = vpop.trf.xlu0
        %v316 = vpop.trf.xlu0
        %s317 = sld [smem:[#allocation2]]
        %v318 = vstv %s317
        %v319 = vadd.f32 %v301, %v318
        %vm320 = vcmask 125952
        %321 = vst.msk [vmem:[%s177] sm:$0xf] %vm320, %v319
        %s322 = sand.u32 %s94, 1
        %s323 = scalar_lea.sflag [#allocation4], %s322
        %s324 = sand.u32 %s94, 1
        %s325 = smul.addr %s324, 4
        %s326 = scalar_lea.vmem [#allocation3], %s325
        // Predicated region
        $region33: #{tpu_custom_call.1} parent=31 // pred_check
          %p327 = pneg %p104
        $region34: #{tpu_custom_call.1} parent=31 // pred_check_branch
          %329 = sbr.rel (%p327) target = $region36
        $region35: #{tpu_custom_call.1} parent=31 // pred_region
          %s331 = ssub.s32 64, 64
          %332 = vsyncadd %s323, %s331
          %s333 = smul.addr %s18, 64
          %s334 = scalar_lea.hbm %s3, %s333
          %s336 = sshll.u32 %s326, 4
          %s337 = int_to_ptr.vmem [resolvable:$true] %s336
          %339 = dma.vmem_to_hbm [thread:$0]  %s337, 64, %s334, %s323
        $region36: #{tpu_custom_call.1} parent=31 // pred_fallthru
          _
      $region32: #{tpu_custom_call.1} parent=5 // pred_fallthru
        _
      %p340 = scmp.le.s32.totalorder 2, %s13
      // Predicated region
      $region37: #{tpu_custom_call.1} parent=5 // pred_check
        %p341 = pneg %p340
      $region38: #{tpu_custom_call.1} parent=5 // pred_check_branch
        %343 = sbr.rel (%p341) target = $region40
      $region39: #{tpu_custom_call.1} parent=5 // pred_region
        %s344 = ssub.s32 %s13, 2
        // Predicated region
        $region41: #{tpu_custom_call.1} parent=39 // pred_check
          %p345 = pneg %p110
        $region42: #{tpu_custom_call.1} parent=39 // pred_check_branch
          %347 = sbr.rel (%p345) target = $region44
        $region43: #{tpu_custom_call.1} parent=39 // pred_region
          %s348 = sand.u32 %s95, 1
          %s349 = scalar_lea.sflag [#allocation4], %s348
          %s350 = sand.u32 %s95, 1
          %s351 = smul.addr %s350, 4
          %s352 = scalar_lea.vmem [#allocation3], %s351
          %353 = dma.done %s349, 64
        $region44: #{tpu_custom_call.1} parent=39 // pred_fallthru
          _
      $region40: #{tpu_custom_call.1} parent=5 // pred_fallthru
        _
    $region6: #{tpu_custom_call.1} parent=1 // loop_footer
      %s17 = sadd.s32 1, %s13
    $region7: #{tpu_custom_call.1} parent=1 // loop_footer_branch
      %12 = sbr.rel target = $region3
    $region8: #{tpu_custom_call.1} parent=1 // loop_exit
      _
    %354 = vsyncpa [#allocation4], 1
    %s355 = scalar_lea.sflag [#allocation4], 1
    %356 = vsyncpa %s355, 1

</llo_original>
